<compile_context>
chip_gen: v5e
topology: v5e:2x2
jax: 0.10.0
libtpu: 0.0.40
codegen_flags: <defaults>
</compile_context>

<pallas_src>
import functools

import jax
import jax.numpy as jnp
from jax.experimental import pallas as pl
from jax.experimental.pallas import tpu as pltpu


def _round_up(x, m):
    return (x + m - 1) // m * m


def _sublane(dtype):
    # Minimum sublane multiple for the dtype (f32: 8, bf16: 16, int8/fp8: 32).
    return max(8, 32 // jnp.dtype(dtype).itemsize)


@functools.lru_cache(maxsize=1)
def _device_config():
    """Generation-aware knobs: (lane_target, two_tensorcores, vmem_cap, tile_bytes)."""
    try:
        kind = jax.devices()[0].device_kind.lower()
    except Exception:  # pragma: no cover - no device attached
        kind = ""
    is_v7 = ("v7" in kind) or ("7x" in kind)
    old_gen = any(t in kind for t in ("v2", "v3", "v4", "v5"))
    lane_target = 128 if old_gen else 256        # v6e/v7x MXU is 2x256^2
    two_tc = is_v7                               # v7x: 2 TensorCores per chip
    if is_v7:
        vmem_cap, tile_bytes = 48 << 20, 4 << 20     # only 64 MiB physical VMEM
    elif old_gen:
        vmem_cap, tile_bytes = 96 << 20, 4 << 20     # v5e: ~0.8 TB/s HBM
    else:
        vmem_cap, tile_bytes = 96 << 20, 8 << 20     # v6e: 1.4 TB/s, 128 MiB VMEM
    return lane_target, two_tc, vmem_cap, tile_bytes


def _senet_kernel(x_ref, w1t_ref, w2t_ref, o_ref):
    # x:(TB, Dp)  w1t:(Dp, Hp)  w2t:(Hp, Dp)  ->  o:(TB, Dp)
    x = x_ref[...]
    h = jnp.dot(x, w1t_ref[...], preferred_element_type=jnp.float32)
    h = jnp.maximum(h, 0.0)                                       # ReLU
    z = jnp.dot(h.astype(w2t_ref.dtype), w2t_ref[...],
                preferred_element_type=jnp.float32)
    # sigmoid(z) = 1 / (1 + exp(-z)): exp and approx reciprocal both ride the
    # EUP slot, keeping the epilogue off the VALU divide path.
    # (Swap for jax.nn.sigmoid if a bit-exact f32 sigmoid is required.)
    o_ref[...] = pl.reciprocal(1.0 + jnp.exp(-z), approx=True).astype(o_ref.dtype)


def senet_prepare(w1, w2):
    """One-time weight prep (do NOT call per forward step).

    w1: (H, D) = fc[0].weight, w2: (D, H) = fc[2].weight (PyTorch layout).
    Returns pre-transposed, lane-packed weights:
      w1t_p: (pack*D, pack*H), w2t_p: (pack*H, pack*D) -- block-diagonal when
      pack > 1, so the `pack` batch rows packed along lanes stay independent.
    """
    H, D = w1.shape
    lane_target, _, _, _ = _device_config()
    pack = 1
    for target in (lane_target, 128):
        if D <= target and target % D == 0:
            pack = target // D
            break
    # TODO(synk): if D < 128 and D does not divide 128, pad D up to 128 here
    # instead of silently falling back to pack=1 (masked-store path).
    w1t, w2t = w1.T, w2.T                        # (D, H), (H, D)
    if pack > 1:
        eye = jnp.eye(pack, dtype=w1.dtype)
        w1t = jnp.kron(eye, w1t)                 # (pack*D, pack*H) block-diag
        w2t = jnp.kron(eye, w2t)                 # (pack*H, pack*D) block-diag
    return w1t, w2t


def senet_forward(x, w1t_p, w2t_p, *, tile_bytes=None):
    """x: (..., D); weights from senet_prepare(). Returns the sigmoid gate y."""
    orig_shape = x.shape
    D = orig_shape[-1]
    Dp, Hp = w1t_p.shape
    assert Dp % D == 0 and w2t_p.shape == (Hp, Dp)
    pack = Dp // D

    _, two_tc, vmem_cap, default_tile = _device_config()
    if tile_bytes is None:
        tile_bytes = default_tile

    itemsize = jnp.dtype(x.dtype).itemsize
    w_isz = jnp.dtype(w1t_p.dtype).itemsize
    sub = _sublane(x.dtype)

    xf = x.reshape(-1, D)
    n = xf.shape[0]

    # Pad only up to a multiple of `pack` (<= pack-1 rows). The ragged last
    # grid block is handled by Pallas' masked edge loads/stores (rows are
    # independent), so there is no pad-to-grid / slice HBM pass in the wrapper.
    rows = pl.cdiv(n, pack)
    n_pad = rows * pack
    if n_pad != n:
        xf = jnp.pad(xf, ((0, n_pad - n), (0, 0)))
    xp = xf.reshape(rows, Dp)                    # lane-dense: last dim = pack*D

    # Batch tile: large enough (~tile_bytes of x per step) that the ~0.35us
    # per-grid-step overhead is small next to the HBM DMA time, small enough
    # that double-buffered x/out tiles + f32 intermediates fit VMEM.
    tb = max(sub, _round_up(tile_bytes // (Dp * itemsize), sub))
    tb = min(tb, _round_up(rows, sub))
    if two_tc and rows >= 2 * sub:
        # Keep at least two grid steps so the "parallel" axis can shard across
        # both v7x TensorCores.
        tb = min(tb, _round_up(pl.cdiv(rows, 2), sub))
    grid_m = pl.cdiv(rows, tb)

    vmem_need = (
        4 * tb * Dp * itemsize                   # x + out tiles, double-buffered
        + 4 * Dp * Hp * w_isz                    # both weight blocks (<=2 bufs)
        + tb * (Hp + 2 * Dp) * 4                 # f32 h / z / epilogue scratch
    )
    vmem_limit = int(min(vmem_cap, max(32 << 20, int(vmem_need * 1.3))))

    cost = pl.CostEstimate(
        flops=2 * 2 * grid_m * tb * Dp * Hp,
        transcendentals=grid_m * tb * Dp,
        bytes_accessed=2 * rows * Dp * itemsize + 2 * Dp * Hp * w_isz,
    )

    weight_kwargs = {}
    if hasattr(pl, "Buffered") and Dp * Hp * w_isz >= (4 << 20):
        # Grid-invariant weights (constant index_map -> single DMA): drop the
        # useless second pipeline buffer once the blocks are large enough for
        # the saved VMEM to matter (production SE widths / v7x's 64 MiB VMEM).
        weight_kwargs = dict(pipeline_mode=pl.Buffered(1))

    yp = pl.pallas_call(
        _senet_kernel,
        out_shape=jax.ShapeDtypeStruct((rows, Dp), x.dtype),
        grid=(grid_m,),
        in_specs=[
            pl.BlockSpec((tb, Dp), lambda i: (i, 0)),
            pl.BlockSpec((Dp, Hp), lambda i: (0, 0), **weight_kwargs),
            pl.BlockSpec((Hp, Dp), lambda i: (0, 0), **weight_kwargs),
        ],
        out_specs=pl.BlockSpec((tb, Dp), lambda i: (i, 0)),
        compiler_params=pltpu.CompilerParams(
            dimension_semantics=("parallel",),
            vmem_limit_bytes=vmem_limit),
        cost_estimate=cost,
    )(xp, w1t_p, w2t_p)

    y = yp.reshape(n_pad, D)
    if n_pad != n:
        y = y[:n]
    return y.reshape(orig_shape)


def senet_reference(x, w1, w2):
    h = jnp.maximum(x @ w1.T, 0.0)
    return jax.nn.sigmoid(h @ w2.T)


if __name__ == "__main__":
    # Module-consistent shapes: input_dim=32, reduction=2.
    D, R = 32, 2
    H = D // R

    key = jax.random.PRNGKey(0)
    kx, k1, k2, kb = jax.random.split(key, 4)

    # Deterministic synthetic weights (same shapes as the nn.Linear weights).
    w1 = jax.random.normal(k1, (H, D), dtype=jnp.float32) * (1.0 / jnp.sqrt(D))
    w2 = jax.random.normal(k2, (D, H), dtype=jnp.float32) * (1.0 / jnp.sqrt(H))

    w1t_p, w2t_p = senet_prepare(w1, w2)     # one-time transpose + lane packing
    fwd = jax.jit(senet_forward)

    # Small, module-consistent batch: exercises the <=pack-1 row pad, the
    # masked partial-block path, and the leading-dim flatten.
    x_small = jax.random.normal(kx, (2, 3, D), dtype=jnp.float32)
    y_small = jax.block_until_ready(fwd(x_small, w1t_p, w2t_p))
    assert y_small.shape == x_small.shape
    assert jnp.allclose(y_small, senet_reference(x_small, w1, w2),
                        atol=2e-3, rtol=2e-3)

    # Batched f32 path: lane-dense tiles across the parallel batch grid.
    x_big = jax.random.normal(kb, (2048, D), dtype=jnp.float32)
    y_big = jax.block_until_ready(fwd(x_big, w1t_p, w2t_p))
    assert y_big.shape == x_big.shape
    assert jnp.allclose(y_big, senet_reference(x_big, w1, w2),
                        atol=2e-3, rtol=2e-3)

    # bf16 I/O path (halves the dominant x/y HBM traffic; MXU accumulation and
    # the sigmoid stay f32 inside the kernel).
    w1t_bf, w2t_bf = senet_prepare(w1.astype(jnp.bfloat16),
                                   w2.astype(jnp.bfloat16))
    y_bf = jax.block_until_ready(
        fwd(x_big.astype(jnp.bfloat16), w1t_bf, w2t_bf))
    assert jnp.allclose(y_bf.astype(jnp.float32),
                        senet_reference(x_big, w1, w2),
                        atol=3e-2, rtol=3e-2)

    print("KERNEL_OK")
</pallas_src>

<mosaic_0001>
module attributes {stable_mosaic.version = 11 : i64} {
  func.func @_senet_kernel(%arg0: i32, %arg1: memref<8x256xf32, #tpu.memory_space<vmem>>, %arg2: memref<256x128xf32, #tpu.memory_space<vmem>>, %arg3: memref<128x256xf32, #tpu.memory_space<vmem>>, %arg4: memref<8x256xf32, #tpu.memory_space<vmem>>) attributes {dimension_semantics = [#tpu.dimension_semantics<parallel>], iteration_bounds = array<i64: 1>, scalar_prefetch = 0 : i64, scratch_operands = 0 : i64, tpu.core_type = #tpu.core_type<tc>, window_params = [{transform_indices = @transform_0, window_bounds = array<i64: 8, 256>}, {pipeline_mode = #tpu.pipeline_mode<synchronous>, transform_indices = @transform_1, window_bounds = array<i64: 256, 128>}, {pipeline_mode = #tpu.pipeline_mode<synchronous>, transform_indices = @transform_2, window_bounds = array<i64: 128, 256>}, {transform_indices = @transform_3, window_bounds = array<i64: 8, 256>}]} {
    %c0 = arith.constant 0 : index
    %c0_0 = arith.constant 0 : index
    %0 = vector.load %arg1[%c0, %c0_0] : memref<8x256xf32, #tpu.memory_space<vmem>>, vector<8x256xf32>
    %c0_1 = arith.constant 0 : index
    %c0_2 = arith.constant 0 : index
    %1 = vector.load %arg2[%c0_1, %c0_2] : memref<256x128xf32, #tpu.memory_space<vmem>>, vector<256x128xf32>
    %cst = arith.constant dense<0.000000e+00> : vector<8x128xf32>
    %2 = tpu.matmul %0, %1, %cst {dimension_numbers = #tpu.dot_dimension_numbers<[1], [0], [0], [1], [0, 0, 1, 1], [], []>} : vector<8x256xf32>, vector<256x128xf32>, vector<8x128xf32> -> vector<8x128xf32>
    %cst_3 = arith.constant 0.000000e+00 : f32
    %3 = vector.broadcast %cst_3 : f32 to vector<8x128xf32>
    %4 = arith.maximumf %2, %3 : vector<8x128xf32>
    %c0_4 = arith.constant 0 : index
    %c0_5 = arith.constant 0 : index
    %5 = vector.load %arg3[%c0_4, %c0_5] : memref<128x256xf32, #tpu.memory_space<vmem>>, vector<128x256xf32>
    %cst_6 = arith.constant dense<0.000000e+00> : vector<8x256xf32>
    %6 = tpu.matmul %4, %5, %cst_6 {dimension_numbers = #tpu.dot_dimension_numbers<[1], [0], [0], [1], [0, 0, 1, 1], [], []>} : vector<8x128xf32>, vector<128x256xf32>, vector<8x256xf32> -> vector<8x256xf32>
    %cst_7 = arith.constant 0.000000e+00 : f32
    %7 = vector.broadcast %cst_7 : f32 to vector<8x256xf32>
    %8 = arith.subf %7, %6 : vector<8x256xf32>
    %9 = math.exp %8 : vector<8x256xf32>
    %cst_8 = arith.constant 1.000000e+00 : f32
    %10 = vector.broadcast %cst_8 : f32 to vector<8x256xf32>
    %11 = arith.addf %10, %9 : vector<8x256xf32>
    %12 = tpu.reciprocal %11 {approx = true} : vector<8x256xf32> -> vector<8x256xf32>
    %c0_9 = arith.constant 0 : index
    %c0_10 = arith.constant 0 : index
    %13 = vector.load %arg4[%c0_9, %c0_10] : memref<8x256xf32, #tpu.memory_space<vmem>>, vector<8x256xf32>
    tpu.vector_store %arg4[%c0_9, %c0_10], %12 {strides = array<i32>} : memref<8x256xf32, #tpu.memory_space<vmem>>, vector<8x256xf32>,
    return
  }
  func.func @transform_0(%arg0: i32) -> (i32, i32) {
    %c0_i32 = arith.constant 0 : i32
    %c0_i32_0 = arith.constant 0 : i32
    return %arg0, %c0_i32 : i32, i32
  }
  func.func @transform_1(%arg0: i32) -> (i32, i32) {
    %c0_i32 = arith.constant 0 : i32
    %c0_i32_0 = arith.constant 0 : i32
    %c0_i32_1 = arith.constant 0 : i32
    return %c0_i32, %c0_i32_0 : i32, i32
  }
  func.func @transform_2(%arg0: i32) -> (i32, i32) {
    %c0_i32 = arith.constant 0 : i32
    %c0_i32_0 = arith.constant 0 : i32
    %c0_i32_1 = arith.constant 0 : i32
    return %c0_i32, %c0_i32_0 : i32, i32
  }
  func.func @transform_3(%arg0: i32) -> (i32, i32) {
    %c0_i32 = arith.constant 0 : i32
    %c0_i32_0 = arith.constant 0 : i32
    return %arg0, %c0_i32 : i32, i32
  }
}

</mosaic_0001>

<llo_original>
// kernel: senet_forward.1
$region0: #{senet_forward.1}
  #allocation0 [shape = 'u32[]', space=smem, size = 0x4, offset = 0x4, fixed_abs, tag = 'smem constant byte address 0x4 - core index']
  #allocation1 [shape = 'u32[72,128]{1,0:T(1,128)}', space=vmem, size = 0x9000, scoped, tag = 'internal scratch']
  %s0 = inlined_call_operand.vmem [shape: f32[1,256], index: 0, kind: input, shape index: {}]
  %s1 = inlined_call_operand.hbm [shape: f32[256,128], index: 1, kind: input, shape index: {}]
  %s2 = inlined_call_operand.hbm [shape: f32[128,256], index: 2, kind: input, shape index: {}]
  %s3 = inlined_call_operand.vmem [shape: f32[1,256], index: 3, kind: output, shape index: {}]
  %s4 = sld [smem:[#allocation0]]
  $region60: #{senet_forward.1} parent=0
    _
  %s6 = ssub.s32 1, %s4
  %s7 = scalar_select 0, %s6, %s4
  $region1: #{senet_forward.1} parent=0
    #allocation2 [shape = 'u8[131072]{0}', space=vmem, size = 0x20000, scoped, tag = 'input window, operand 1, single buffered']
    #allocation3 [shape = 's32[1]{0}', space=sflag, size = 0x4, scoped, tag = 'scoped memory for senet_forward.1']
    #allocation4 [shape = 'u8[131072]{0}', space=vmem, size = 0x20000, scoped, tag = 'input window, operand 2, single buffered']
    #allocation5 [shape = 's32[1]{0}', space=sflag, size = 0x4, scoped, tag = 'scoped memory for senet_forward.1']
    #allocation6 [shape = 'u8[8192]{0}', space=vmem, size = 0x2000, scoped, tag = 'output window, operand 0, single buffered']
    %8 = vsyncpa [#allocation3], 0
    %9 = vsyncpa [#allocation5], 0
    // Predicated region
    $region2: #{senet_forward.1} parent=1 // pred_check
      _
    $region3: #{senet_forward.1} parent=1 // pred_check_branch
      %11 = sbr.rel (0) target = $region5
    $region4: #{senet_forward.1} parent=1 // pred_region
      _
    $region5: #{senet_forward.1} parent=1 // pred_fallthru
      _
    // Predicated region
    $region6: #{senet_forward.1} parent=1 // pred_check
      _
    $region7: #{senet_forward.1} parent=1 // pred_check_branch
      %13 = sbr.rel (0) target = $region9
    $region8: #{senet_forward.1} parent=1 // pred_region
      %15 = vsyncadd [#allocation3], 0
      %s16 = sshll.u32 %s1, 4
      %s17 = int_to_ptr.hbm [resolvable:$true] %s16
      %s18 = sshll.u32 [#allocation2], 4
      %s19 = int_to_ptr.vmem [resolvable:$true] %s18
      %24 = dma.hbm_to_vmem [thread:$0]  %s17, 4096, %s19, [#allocation3], 128, 128, 8
    $region9: #{senet_forward.1} parent=1 // pred_fallthru
      _
    // Predicated region
    $region10: #{senet_forward.1} parent=1 // pred_check
      _
    $region11: #{senet_forward.1} parent=1 // pred_check_branch
      %26 = sbr.rel (0) target = $region13
    $region12: #{senet_forward.1} parent=1 // pred_region
      %28 = vsyncadd [#allocation5], 0
      %s29 = sshll.u32 %s2, 4
      %s30 = int_to_ptr.hbm [resolvable:$true] %s29
      %s31 = sshll.u32 [#allocation4], 4
      %s32 = int_to_ptr.vmem [resolvable:$true] %s31
      %37 = dma.hbm_to_vmem [thread:$0]  %s30, 4096, %s32, [#allocation5], 256, 256, 16
    $region13: #{senet_forward.1} parent=1 // pred_fallthru
      _
    // Predicated region
    $region14: #{senet_forward.1} parent=1 // pred_check
      _
    $region15: #{senet_forward.1} parent=1 // pred_check_branch
      %39 = sbr.rel (0) target = $region17
    $region16: #{senet_forward.1} parent=1 // pred_region
      %41 = dma.done [#allocation3], 4096
    $region17: #{senet_forward.1} parent=1 // pred_fallthru
      _
    // Predicated region
    $region18: #{senet_forward.1} parent=1 // pred_check
      _
    $region19: #{senet_forward.1} parent=1 // pred_check_branch
      %43 = sbr.rel (0) target = $region21
    $region20: #{senet_forward.1} parent=1 // pred_region
      %45 = dma.done [#allocation5], 4096
    $region21: #{senet_forward.1} parent=1 // pred_fallthru
      _
    %v46 = vld [vmem:[%s0] sm:$0x3]
    %v47 = vld [vmem:[%s0 + $0x2] sm:$0x3]
    %v48 = vld [vmem:[%s0 + $0x4] sm:$0x3]
    %v49 = vld [vmem:[%s0 + $0x6] sm:$0x3]
    %v50 = vld [vmem:[%s0 + $0x8] sm:$0x3]
    %v51 = vld [vmem:[%s0 + $0xa] sm:$0x3]
    %v52 = vld [vmem:[%s0 + $0xc] sm:$0x3]
    %v53 = vld [vmem:[%s0 + $0xe] sm:$0x3]
    %v54 = vld [vmem:[#allocation2] sm:$0xff]
    %v55 = vld [vmem:[#allocation2 + $0x8] sm:$0xff]
    %v56 = vld [vmem:[#allocation2 + $0x10] sm:$0xff]
    %v57 = vld [vmem:[#allocation2 + $0x18] sm:$0xff]
    %v58 = vld [vmem:[#allocation2 + $0x20] sm:$0xff]
    %v59 = vld [vmem:[#allocation2 + $0x28] sm:$0xff]
    %v60 = vld [vmem:[#allocation2 + $0x30] sm:$0xff]
    %v61 = vld [vmem:[#allocation2 + $0x38] sm:$0xff]
    %v62 = vld [vmem:[#allocation2 + $0x40] sm:$0xff]
    %v63 = vld [vmem:[#allocation2 + $0x48] sm:$0xff]
    %v64 = vld [vmem:[#allocation2 + $0x50] sm:$0xff]
    %v65 = vld [vmem:[#allocation2 + $0x58] sm:$0xff]
    %v66 = vld [vmem:[#allocation2 + $0x60] sm:$0xff]
    %v67 = vld [vmem:[#allocation2 + $0x68] sm:$0xff]
    %v68 = vld [vmem:[#allocation2 + $0x70] sm:$0xff]
    %v69 = vld [vmem:[#allocation2 + $0x78] sm:$0xff]
    %v70 = vld [vmem:[#allocation2 + $0x80] sm:$0xff]
    %v71 = vld [vmem:[#allocation2 + $0x88] sm:$0xff]
    %v72 = vld [vmem:[#allocation2 + $0x90] sm:$0xff]
    %v73 = vld [vmem:[#allocation2 + $0x98] sm:$0xff]
    %v74 = vld [vmem:[#allocation2 + $0xa0] sm:$0xff]
    %v75 = vld [vmem:[#allocation2 + $0xa8] sm:$0xff]
    %v76 = vld [vmem:[#allocation2 + $0xb0] sm:$0xff]
    %v77 = vld [vmem:[#allocation2 + $0xb8] sm:$0xff]
    %v78 = vld [vmem:[#allocation2 + $0xc0] sm:$0xff]
    %v79 = vld [vmem:[#allocation2 + $0xc8] sm:$0xff]
    %v80 = vld [vmem:[#allocation2 + $0xd0] sm:$0xff]
    %v81 = vld [vmem:[#allocation2 + $0xd8] sm:$0xff]
    %v82 = vld [vmem:[#allocation2 + $0xe0] sm:$0xff]
    %v83 = vld [vmem:[#allocation2 + $0xe8] sm:$0xff]
    %v84 = vld [vmem:[#allocation2 + $0xf0] sm:$0xff]
    %v85 = vld [vmem:[#allocation2 + $0xf8] sm:$0xff]
    %94 = vst [vmem:[#allocation1] ss:$9 sm:$0xff] %v46
    %s95 = scalar_lea.vmem [#allocation1], 1
    %96 = vst [vmem:[%s95] ss:$9 sm:$0xff] %v47
    %s97 = scalar_lea.vmem [#allocation1], 2
    %98 = vst [vmem:[%s97] ss:$9 sm:$0xff] %v48
    %s99 = scalar_lea.vmem [#allocation1], 3
    %100 = vst [vmem:[%s99] ss:$9 sm:$0xff] %v49
    %s101 = scalar_lea.vmem [#allocation1], 4
    %102 = vst [vmem:[%s101] ss:$9 sm:$0xff] %v50
    %s103 = scalar_lea.vmem [#allocation1], 5
    %104 = vst [vmem:[%s103] ss:$9 sm:$0xff] %v51
    %s105 = scalar_lea.vmem [#allocation1], 6
    %106 = vst [vmem:[%s105] ss:$9 sm:$0xff] %v52
    %s107 = scalar_lea.vmem [#allocation1], 7
    %108 = vst [vmem:[%s107] ss:$9 sm:$0xff] %v53
    %v109 = vld [vmem:[#allocation1] sm:$0xff]
    %v110 = vld [vmem:[#allocation1 + $0x9] sm:$0xff]
    %113 = vmatpush.msra.mxu0 %v69
    %114 = vmatpush.msra.mxu0 %v68
    %115 = vmatpush.msra.mxu0 %v67
    %116 = vmatpush.msra.mxu0 %v66
    %117 = vmatpush.msra.mxu0 %v65
    %118 = vmatpush.msra.mxu0 %v64
    %119 = vmatpush.msra.mxu0 %v63
    %120 = vmatpush.msra.mxu0 %v62
    %121 = vmatpush.msra.mxu0 %v61
    %122 = vmatpush.msra.mxu0 %v60
    %123 = vmatpush.msra.mxu0 %v59
    %124 = vmatpush.msra.mxu0 %v58
    %125 = vmatpush.msra.mxu0 %v57
    %126 = vmatpush.msra.mxu0 %v56
    %127 = vmatpush.msra.mxu0 %v55
    %128 = vmatpush.msra.mxu0 %v54
    %129 = vmatmul.f32.gmra.mxu0 %v109
    %v130 = vpop.f32.mrf.mxu0
    %v131 = vadd.f32 0.0, %v130
    %132 = vdwg.mxu0
    %133 = vmatpush.msra.mxu0 %v85
    %134 = vmatpush.msra.mxu0 %v84
    %135 = vmatpush.msra.mxu0 %v83
    %136 = vmatpush.msra.mxu0 %v82
    %137 = vmatpush.msra.mxu0 %v81
    %138 = vmatpush.msra.mxu0 %v80
    %139 = vmatpush.msra.mxu0 %v79
    %140 = vmatpush.msra.mxu0 %v78
    %141 = vmatpush.msra.mxu0 %v77
    %142 = vmatpush.msra.mxu0 %v76
    %143 = vmatpush.msra.mxu0 %v75
    %144 = vmatpush.msra.mxu0 %v74
    %145 = vmatpush.msra.mxu0 %v73
    %146 = vmatpush.msra.mxu0 %v72
    %147 = vmatpush.msra.mxu0 %v71
    %148 = vmatpush.msra.mxu0 %v70
    %149 = vmatmul.f32.gmra.mxu0 %v110
    %v150 = vpop.f32.mrf.mxu0
    %v151 = vadd.f32 %v131, %v150
    %152 = vdwg.mxu0
    %v153 = vmax.f32 %v151, 0.0
    %v154 = vld [vmem:[#allocation4] sm:$0xff]
    %v155 = vld [vmem:[#allocation4 + $0x8] sm:$0xff]
    %v156 = vld [vmem:[#allocation4 + $0x10] sm:$0xff]
    %v157 = vld [vmem:[#allocation4 + $0x18] sm:$0xff]
    %v158 = vld [vmem:[#allocation4 + $0x20] sm:$0xff]
    %v159 = vld [vmem:[#allocation4 + $0x28] sm:$0xff]
    %v160 = vld [vmem:[#allocation4 + $0x30] sm:$0xff]
    %v161 = vld [vmem:[#allocation4 + $0x38] sm:$0xff]
    %v162 = vld [vmem:[#allocation4 + $0x40] sm:$0xff]
    %v163 = vld [vmem:[#allocation4 + $0x48] sm:$0xff]
    %v164 = vld [vmem:[#allocation4 + $0x50] sm:$0xff]
    %v165 = vld [vmem:[#allocation4 + $0x58] sm:$0xff]
    %v166 = vld [vmem:[#allocation4 + $0x60] sm:$0xff]
    %v167 = vld [vmem:[#allocation4 + $0x68] sm:$0xff]
    %v168 = vld [vmem:[#allocation4 + $0x70] sm:$0xff]
    %v169 = vld [vmem:[#allocation4 + $0x78] sm:$0xff]
    %v170 = vld [vmem:[#allocation4 + $0x80] sm:$0xff]
    %v171 = vld [vmem:[#allocation4 + $0x88] sm:$0xff]
    %v172 = vld [vmem:[#allocation4 + $0x90] sm:$0xff]
    %v173 = vld [vmem:[#allocation4 + $0x98] sm:$0xff]
    %v174 = vld [vmem:[#allocation4 + $0xa0] sm:$0xff]
    %v175 = vld [vmem:[#allocation4 + $0xa8] sm:$0xff]
    %v176 = vld [vmem:[#allocation4 + $0xb0] sm:$0xff]
    %v177 = vld [vmem:[#allocation4 + $0xb8] sm:$0xff]
    %v178 = vld [vmem:[#allocation4 + $0xc0] sm:$0xff]
    %v179 = vld [vmem:[#allocation4 + $0xc8] sm:$0xff]
    %v180 = vld [vmem:[#allocation4 + $0xd0] sm:$0xff]
    %v181 = vld [vmem:[#allocation4 + $0xd8] sm:$0xff]
    %v182 = vld [vmem:[#allocation4 + $0xe0] sm:$0xff]
    %v183 = vld [vmem:[#allocation4 + $0xe8] sm:$0xff]
    %v184 = vld [vmem:[#allocation4 + $0xf0] sm:$0xff]
    %v185 = vld [vmem:[#allocation4 + $0xf8] sm:$0xff]
    %186 = vmatpush.msra.mxu0 %v184
    %187 = vmatpush.msra.mxu0 %v182
    %188 = vmatpush.msra.mxu0 %v180
    %189 = vmatpush.msra.mxu0 %v178
    %190 = vmatpush.msra.mxu0 %v176
    %191 = vmatpush.msra.mxu0 %v174
    %192 = vmatpush.msra.mxu0 %v172
    %193 = vmatpush.msra.mxu0 %v170
    %194 = vmatpush.msra.mxu0 %v168
    %195 = vmatpush.msra.mxu0 %v166
    %196 = vmatpush.msra.mxu0 %v164
    %197 = vmatpush.msra.mxu0 %v162
    %198 = vmatpush.msra.mxu0 %v160
    %199 = vmatpush.msra.mxu0 %v158
    %200 = vmatpush.msra.mxu0 %v156
    %201 = vmatpush.msra.mxu0 %v154
    %202 = vmatmul.f32.gmra.mxu0 %v153
    %v203 = vpop.f32.mrf.mxu0
    %v204 = vadd.f32 0.0, %v203
    %205 = vdwg.mxu0
    %206 = vmatpush.msra.mxu0 %v185
    %207 = vmatpush.msra.mxu0 %v183
    %208 = vmatpush.msra.mxu0 %v181
    %209 = vmatpush.msra.mxu0 %v179
    %210 = vmatpush.msra.mxu0 %v177
    %211 = vmatpush.msra.mxu0 %v175
    %212 = vmatpush.msra.mxu0 %v173
    %213 = vmatpush.msra.mxu0 %v171
    %214 = vmatpush.msra.mxu0 %v169
    %215 = vmatpush.msra.mxu0 %v167
    %216 = vmatpush.msra.mxu0 %v165
    %217 = vmatpush.msra.mxu0 %v163
    %218 = vmatpush.msra.mxu0 %v161
    %219 = vmatpush.msra.mxu0 %v159
    %220 = vmatpush.msra.mxu0 %v157
    %221 = vmatpush.msra.mxu0 %v155
    %222 = vmatmul.f32.gmra.mxu0 %v153
    %v223 = vpop.f32.mrf.mxu0
    %v224 = vadd.f32 0.0, %v223
    %225 = vdwg.mxu0
    %v226 = vsub.f32 0.0, %v204
    %v227 = vsub.f32 0.0, %v224
    %v228 = vmul.f32 %v226, 1.442695
    %v229 = vpow.pop %v228
    %v230 = vmul.f32 %v227, 1.442695
    %v231 = vpow.pop %v230
    %v232 = vadd.f32 %v229, 1.0
    %v233 = vadd.f32 %v231, 1.0
    %v234 = vrcp.pop %v232
    %v235 = vrcp.pop %v233
    %v238 = vrot.slane %v235, 7
    %vm239 = vcmask 1040384
    %v240 = vsel %vm239, %v234, %v238
    %vm241 = vcmask 1041409
    %v242 = vsel %vm241, %v234, %v238
    %v243 = vrot.slane %v242, 1
    %vm244 = vcmask 1042434
    %v245 = vsel %vm244, %v234, %v238
    %v246 = vrot.slane %v245, 2
    %vm247 = vcmask 1043459
    %v248 = vsel %vm247, %v234, %v238
    %v249 = vrot.slane %v248, 3
    %vm250 = vcmask 1044484
    %v251 = vsel %vm250, %v234, %v238
    %v252 = vrot.slane %v251, 4
    %vm253 = vcmask 1045509
    %v254 = vsel %vm253, %v234, %v238
    %v255 = vrot.slane %v254, 5
    %vm256 = vcmask 1046534
    %v257 = vsel %vm256, %v234, %v238
    %v258 = vrot.slane %v257, 6
    %vm259 = vcmask 1046528
    %v260 = vsel %vm259, %v238, %v234
    %v261 = vrot.slane %v260, 7
    %v270 = vlaneseq
    %vm271 = vcmp.ge.s32.totalorder %v270, 0
    %vm272 = vcmp.lt.s32.totalorder %v270, 256
    %vm273 = vmand %vm271, %vm272
    %274 = vst.msk [vmem:[#allocation6] sm:$0x3] %vm273, %v240
    %275 = vst.msk [vmem:[#allocation6 + $0x2] sm:$0x3] %vm273, %v243
    %276 = vst.msk [vmem:[#allocation6 + $0x4] sm:$0x3] %vm273, %v246
    %277 = vst.msk [vmem:[#allocation6 + $0x6] sm:$0x3] %vm273, %v249
    %278 = vst.msk [vmem:[#allocation6 + $0x8] sm:$0x3] %vm273, %v252
    %279 = vst.msk [vmem:[#allocation6 + $0xa] sm:$0x3] %vm273, %v255
    %280 = vst.msk [vmem:[#allocation6 + $0xc] sm:$0x3] %vm273, %v258
    %281 = vst.msk [vmem:[#allocation6 + $0xe] sm:$0x3] %vm273, %v261
    // Predicated region
    $region22: #{senet_forward.1} parent=1 // pred_check
      _
    $region23: #{senet_forward.1} parent=1 // pred_check_branch
      %283 = sbr.rel (0) target = $region25
    $region24: #{senet_forward.1} parent=1 // pred_region
      // Predicated region
      $region26: #{senet_forward.1} parent=24 // pred_check
        _
      $region27: #{senet_forward.1} parent=24 // pred_check_branch
        %285 = sbr.rel (0) target = $region29
      $region28: #{senet_forward.1} parent=24 // pred_region
        // Predicated region
        $region30: #{senet_forward.1} parent=28 // pred_check
          _
        $region31: #{senet_forward.1} parent=28 // pred_check_branch
          %287 = sbr.rel target = $region33
        $region32: #{senet_forward.1} parent=28 // pred_region
          // Predicated region
          $region45: #{senet_forward.1} parent=32 // pred_check
            _
          $region46: #{senet_forward.1} parent=32 // pred_check_branch
            %303 = sbr.rel (0) target = $region48
          $region47: #{senet_forward.1} parent=32 // pred_region
            %s305 = ssub.s32 4, 1
            loop: start=0, step=1, limit=1
            $region49: #{senet_forward.1} parent=47 // loop_pre_header
              _
            $region50: #{senet_forward.1} parent=47 // loop_header
              %s307 = sphi 0, %s311
              %p308 = scmp.ge.s32.totalorder %s307, 1
              %s312 = sphi [#allocation6], [#allocation6]
              %s313 = sphi %s3, %s3
            $region51: #{senet_forward.1} parent=47 // loop_header_branch
              %310 = sbr.rel (%p308) target = $region55
            $region52: #{senet_forward.1} parent=47 // loop_body
              %v314 = vld [vmem:[%s312] sm:%s305]
              %315 = vst [vmem:[%s313] sm:%s305] %v314
            $region53: #{senet_forward.1} parent=47 // loop_footer
              %s311 = sadd.s32 1, %s307
            $region54: #{senet_forward.1} parent=47 // loop_footer_branch
              %306 = sbr.rel target = $region50
            $region55: #{senet_forward.1} parent=47 // loop_exit
              _
          $region48: #{senet_forward.1} parent=32 // pred_fallthru
            _
        $region33: #{senet_forward.1} parent=28 // pred_fallthru
          _
        // Predicated region
        $region34: #{senet_forward.1} parent=28 // pred_check
          _
        $region35: #{senet_forward.1} parent=28 // pred_check_branch
          %289 = sbr.rel (0) target = $region37
        $region36: #{senet_forward.1} parent=28 // pred_region
          %s291 = ssub.s32 4, 1
          loop: start=0, step=1, limit=1
          $region38: #{senet_forward.1} parent=36 // loop_pre_header
            _
          $region39: #{senet_forward.1} parent=36 // loop_header
            %s293 = sphi 0, %s297
            %p294 = scmp.ge.s32.totalorder %s293, 1
            %s298 = sphi [#allocation6], [#allocation6]
            %s299 = sphi %s3, %s3
          $region40: #{senet_forward.1} parent=36 // loop_header_branch
            %296 = sbr.rel (%p294) target = $region44
          $region41: #{senet_forward.1} parent=36 // loop_body
            %v300 = vld [vmem:[%s298] sm:%s291]
            %301 = vst [vmem:[%s299] sm:%s291] %v300
          $region42: #{senet_forward.1} parent=36 // loop_footer
            %s297 = sadd.s32 1, %s293
          $region43: #{senet_forward.1} parent=36 // loop_footer_branch
            %292 = sbr.rel target = $region39
          $region44: #{senet_forward.1} parent=36 // loop_exit
            _
        $region37: #{senet_forward.1} parent=28 // pred_fallthru
          _
      $region29: #{senet_forward.1} parent=24 // pred_fallthru
        _
      %316 = vnop
    $region25: #{senet_forward.1} parent=1 // pred_fallthru
      _
    // Predicated region
    $region56: #{senet_forward.1} parent=1 // pred_check
      _
    $region57: #{senet_forward.1} parent=1 // pred_check_branch
      %318 = sbr.rel (0) target = $region59
    $region58: #{senet_forward.1} parent=1 // pred_region
      _
    $region59: #{senet_forward.1} parent=1 // pred_fallthru
      _
    %319 = vsyncpa [#allocation3], 1
    %320 = vsyncpa [#allocation5], 1

</llo_original>
